<compile_context>
chip_gen: v5e
topology: v5e:2x2
jax: 0.10.0
libtpu: 0.0.40
codegen_flags: <defaults>
</compile_context>

<pallas_src>
import jax
import jax.numpy as jnp
from jax.experimental import pallas as pl
from jax.experimental.pallas import tpu as pltpu


def _round_up(x, m):
    return ((x + m - 1) // m) * m


def _make_kernel(obs_pad, h_pad):
    """Build the fused actor+critic kernel for static sizes (closed over)."""
    def kernel(obs_ref, w_ref, s_ref, out_ref):
        # --- stats / bias rows (static slices of the packed f32 (8, W) slab) ---
        mean    = s_ref[0:1, :obs_pad]        # (1, obs_pad)
        inv_std = s_ref[1:2, :obs_pad]        # (1, obs_pad)
        b1      = s_ref[2:3, :h_pad]          # (1, h_pad)
        b2      = s_ref[3:4, :h_pad]          # (1, h_pad)
        b3      = s_ref[4:5, :h_pad]          # (1, h_pad)

        # --- observation standardization, f32 elementwise (v5e-safe) ---
        x = obs_ref[...]                      # (tile_b, obs_pad) f32
        x = jnp.clip((x - mean) * inv_std, -10.0, 10.0)

        # --- fused actor+critic MLP: bf16 MXU operands, f32 accumulation ---
        w1 = w_ref[0:obs_pad, :]                              # (obs_pad, h_pad) bf16
        w2 = w_ref[obs_pad:obs_pad + h_pad, :]                # (h_pad, h_pad)   bf16
        w3 = w_ref[obs_pad + h_pad:obs_pad + 2 * h_pad, :]    # (h_pad, h_pad)   bf16

        h1 = jnp.tanh(jnp.dot(x.astype(jnp.bfloat16), w1,
                              preferred_element_type=jnp.float32) + b1)
        h2 = jnp.tanh(jnp.dot(h1.astype(jnp.bfloat16), w2,
                              preferred_element_type=jnp.float32) + b2)
        y = jnp.dot(h2.astype(jnp.bfloat16), w3,
                    preferred_element_type=jnp.float32)        # (tile_b, h_pad)

        # lane-dense, unmasked store; cols [0:act_dim]=mu, col act_dim=value,
        # remaining padded cols are exactly zero (zero weights + zero bias).
        out_ref[...] = y + b3

    return kernel


def pack_params(p):
    """One-time transform: pack the 15 raw tensors into two VMEM slabs.

    Weight slab (bf16, (obs_pad + 2*h_pad, h_pad)):
        rows [0:obs_pad]            layer-1 weights  [pi_w1 | v_w1]  (zero-padded)
        rows [obs_pad:+h_pad]       layer-2 block-diag(pi_w2, v_w2)  (zero-padded)
        rows [obs_pad+h_pad:+h_pad] layer-3 block-diag(pi_w3, v_w3)  (zero-padded)
    Stats slab (f32, (8, W)):
        row0 mean, row1 inv_std, row2 b1, row3 b2, row4 b3 (each zero-padded).
    obs_pad is a multiple of 16 so bf16 slab slices stay sublane-tile aligned;
    h_pad is a multiple of 128 so all intermediates and the output are
    full-lane-group wide (unmasked loads/stores, full MXU result lanes).
    """
    obs_dim = p["obs_mean"].shape[1]
    act_dim = p["pi_w3"].shape[1]
    h_pi = p["pi_w1"].shape[1]
    h_v = p["v_w1"].shape[1]
    h_tot = h_pi + h_v
    act_p1 = act_dim + 1

    obs_pad = _round_up(obs_dim, 16)        # bf16 sublane-tile alignment
    h_pad = _round_up(h_tot, 128)           # lane-dense hidden/output width
    assert act_p1 <= h_pad, (
        f"act_dim+1={act_p1} must fit in padded output width {h_pad}")

    f32, bf16 = jnp.float32, jnp.bfloat16

    # layer 1: concatenate along output dim, pad input dim to obs_pad
    w1 = jnp.zeros((obs_pad, h_pad), f32)
    w1 = w1.at[:obs_dim, :h_pi].set(p["pi_w1"].astype(f32))
    w1 = w1.at[:obs_dim, h_pi:h_tot].set(p["v_w1"].astype(f32))
    b1 = jnp.concatenate([p["pi_b1"], p["v_b1"]], axis=1).astype(f32)

    # layer 2: block-diagonal
    w2 = jnp.zeros((h_pad, h_pad), f32)
    w2 = w2.at[:h_pi, :h_pi].set(p["pi_w2"].astype(f32))
    w2 = w2.at[h_pi:h_tot, h_pi:h_tot].set(p["v_w2"].astype(f32))
    b2 = jnp.concatenate([p["pi_b2"], p["v_b2"]], axis=1).astype(f32)

    # layer 3: block-diagonal, output columns padded to h_pad
    w3 = jnp.zeros((h_pad, h_pad), f32)
    w3 = w3.at[:h_pi, :act_dim].set(p["pi_w3"].astype(f32))
    w3 = w3.at[h_pi:h_tot, act_dim:act_p1].set(p["v_w3"].astype(f32))
    b3 = jnp.concatenate([p["pi_b3"], p["v_b3"]], axis=1).astype(f32)

    w_slab = jnp.concatenate([w1, w2, w3], axis=0).astype(bf16)

    width = max(obs_pad, h_pad)
    inv_std = 1.0 / (p["obs_std"].astype(f32) + 1e-8)
    stats = jnp.zeros((8, width), f32)
    stats = stats.at[0, :obs_dim].set(p["obs_mean"][0].astype(f32))
    stats = stats.at[1, :obs_dim].set(inv_std[0])
    stats = stats.at[2, :h_tot].set(b1[0])
    stats = stats.at[3, :h_tot].set(b2[0])
    stats = stats.at[4, :act_p1].set(b3[0])

    # constant log-prob of the deterministic (mean) action
    logp_const = -(jnp.sum(p["log_std"].astype(f32))
                   + 0.5 * act_dim * jnp.log(2.0 * jnp.pi))

    return dict(
        w_slab=w_slab, stats=stats, logp_const=logp_const,
        obs_dim=obs_dim, obs_pad=obs_pad, act_dim=act_dim,
        act_p1=act_p1, h_pad=h_pad,
    )


def actor_critic_step(obs, packed, tile_b=4096):
    """Run the fused ActorCritic step. Returns (a, v, logp_a)."""
    B = obs.shape[0]
    obs_dim = packed["obs_dim"]
    obs_pad = packed["obs_pad"]
    act_dim = packed["act_dim"]
    h_pad = packed["h_pad"]

    # batch tile: multiple of 8, <= padded batch; capped so large batches give
    # >=2 grid steps (lets both v7x TensorCores work on the "parallel" axis).
    b8 = _round_up(B, 8)
    tile_b = _round_up(min(tile_b, b8), 8)
    tile_b = min(tile_b, max(8, _round_up(-(-b8 // 2), 8)))
    b_pad = _round_up(B, tile_b)

    if b_pad == B and obs_pad == obs_dim and obs.dtype == jnp.float32:
        x = obs                               # fast path: no HBM copy
    else:
        x = jnp.zeros((b_pad, obs_pad), jnp.float32)
        x = x.at[:B, :obs_dim].set(obs.astype(jnp.float32))

    kernel = _make_kernel(obs_pad, h_pad)

    # explicit VMEM budget with headroom for the spilled h1/h2/y intermediates
    w_bytes = packed["w_slab"].size * packed["w_slab"].dtype.itemsize
    s_bytes = packed["stats"].size * 4
    vmem_est = (2 * tile_b * obs_pad * 4        # obs tiles (double-buffered)
                + 2 * tile_b * h_pad * 4        # out tiles (double-buffered)
                + 2 * w_bytes + 2 * s_bytes     # resident params
                + 6 * tile_b * h_pad * 4)       # f32/bf16 intermediates
    vmem_limit = int(min(max(vmem_est + (8 << 20), 16 << 20), 48 << 20))

    out = pl.pallas_call(
        kernel,
        out_shape=jax.ShapeDtypeStruct((b_pad, h_pad), jnp.float32),
        grid_spec=pltpu.PrefetchScalarGridSpec(
            num_scalar_prefetch=0,
            grid=(b_pad // tile_b,),
            in_specs=[
                pl.BlockSpec((tile_b, obs_pad), lambda i: (i, 0)),       # obs tile
                pl.BlockSpec(packed["w_slab"].shape, lambda i: (0, 0)),  # weights resident
                pl.BlockSpec(packed["stats"].shape, lambda i: (0, 0)),   # stats resident
            ],
            out_specs=pl.BlockSpec((tile_b, h_pad), lambda i: (i, 0)),
        ),
        compiler_params=pltpu.CompilerParams(
            dimension_semantics=("parallel",),
            vmem_limit_bytes=vmem_limit,
        ),
    )(x, packed["w_slab"], packed["stats"])

    a = out[:B, :act_dim]
    v = out[:B, act_dim]
    logp = jnp.full((B,), packed["logp_const"], jnp.float32)
    return a, v, logp


def make_params(key, obs_dim, act_dim, pi_hidden=(32, 32), val_hidden=(32, 32)):
    """Deterministic synthetic parameters with the shapes ActorCritic.__init__ implies."""
    keys = jax.random.split(key, 16)

    def lin(k, fan_in, fan_out):
        scale = 1.0 / jnp.sqrt(jnp.float32(fan_in))
        kw, kb = jax.random.split(k)
        w = jax.random.uniform(kw, (fan_in, fan_out), jnp.float32, -scale, scale)
        b = jax.random.uniform(kb, (1, fan_out), jnp.float32, -scale, scale)
        return w, b

    pi_w1, pi_b1 = lin(keys[0], obs_dim, pi_hidden[0])
    pi_w2, pi_b2 = lin(keys[1], pi_hidden[0], pi_hidden[1])
    pi_w3, pi_b3 = lin(keys[2], pi_hidden[1], act_dim)
    v_w1, v_b1 = lin(keys[3], obs_dim, val_hidden[0])
    v_w2, v_b2 = lin(keys[4], val_hidden[0], val_hidden[1])
    v_w3, v_b3 = lin(keys[5], val_hidden[1], 1)

    return dict(
        obs_mean=jax.random.normal(keys[6], (1, obs_dim), jnp.float32) * 0.1,
        obs_std=jnp.abs(jax.random.normal(keys[7], (1, obs_dim), jnp.float32)) + 0.5,
        pi_w1=pi_w1, pi_b1=pi_b1,
        pi_w2=pi_w2, pi_b2=pi_b2,
        pi_w3=pi_w3, pi_b3=pi_b3,
        log_std=jnp.full((1, act_dim), -0.5, jnp.float32),
        v_w1=v_w1, v_b1=v_b1,
        v_w2=v_w2, v_b2=v_b2,
        v_w3=v_w3, v_b3=v_b3,
    )


def reference_step(obs, p):
    """Pure-JAX f32 reference mirroring the PyTorch forward (eval path)."""
    x = jnp.clip((obs - p["obs_mean"]) / (p["obs_std"] + 1e-8), -10.0, 10.0)
    hv = jnp.tanh(x @ p["v_w1"] + p["v_b1"])
    hv = jnp.tanh(hv @ p["v_w2"] + p["v_b2"])
    v = (hv @ p["v_w3"] + p["v_b3"])[:, 0]
    h = jnp.tanh(x @ p["pi_w1"] + p["pi_b1"])
    h = jnp.tanh(h @ p["pi_w2"] + p["pi_b2"])
    mu = h @ p["pi_w3"] + p["pi_b3"]
    logp = jnp.sum(-p["log_std"] - 0.5 * jnp.log(2.0 * jnp.pi)
                   + jnp.zeros_like(mu), axis=-1)
    return mu, v, logp


if __name__ == "__main__":
    obs_dim, act_dim, batch = 16, 4, 8
    key = jax.random.PRNGKey(0)
    k_obs, k_par = jax.random.split(key)

    obs = jax.random.normal(k_obs, (batch, obs_dim), jnp.float32)
    params = make_params(k_par, obs_dim, act_dim)
    packed = pack_params(params)  # one-time parameter packing

    a, v, logp = actor_critic_step(obs, packed)
    jax.block_until_ready((a, v, logp))

    a_ref, v_ref, logp_ref = reference_step(obs, params)
    # bf16 MXU operands with f32 accumulation => relaxed tolerance vs f32 ref.
    assert jnp.allclose(a, a_ref, atol=5e-2, rtol=2e-2), "action mismatch"
    assert jnp.allclose(v, v_ref, atol=5e-2, rtol=2e-2), "value mismatch"
    assert jnp.allclose(logp, logp_ref, atol=1e-5), "logp mismatch"

    print("KERNEL_OK")
</pallas_src>

<mosaic_0001>
module attributes {stable_mosaic.version = 11 : i64} {
  func.func @kernel(%arg0: i32, %arg1: memref<8x16xf32, #tpu.memory_space<vmem>>, %arg2: memref<272x128xbf16, #tpu.memory_space<vmem>>, %arg3: memref<8x128xf32, #tpu.memory_space<vmem>>, %arg4: memref<8x128xf32, #tpu.memory_space<vmem>>) attributes {dimension_semantics = [#tpu.dimension_semantics<parallel>], iteration_bounds = array<i64: 1>, scalar_prefetch = 0 : i64, scratch_operands = 0 : i64, tpu.core_type = #tpu.core_type<tc>, window_params = [{transform_indices = @transform_0, window_bounds = array<i64: 8, 16>}, {pipeline_mode = #tpu.pipeline_mode<synchronous>, transform_indices = @transform_1, window_bounds = array<i64: 272, 128>}, {pipeline_mode = #tpu.pipeline_mode<synchronous>, transform_indices = @transform_2, window_bounds = array<i64: 8, 128>}, {transform_indices = @transform_3, window_bounds = array<i64: 8, 128>}]} {
    %c0 = arith.constant 0 : index
    %c0_0 = arith.constant 0 : index
    %0 = vector.load %arg3[%c0, %c0_0] : memref<8x128xf32, #tpu.memory_space<vmem>>, vector<1x16xf32>
    %c1 = arith.constant 1 : index
    %c0_1 = arith.constant 0 : index
    %1 = vector.load %arg3[%c1, %c0_1] : memref<8x128xf32, #tpu.memory_space<vmem>>, vector<1x16xf32>
    %c2 = arith.constant 2 : index
    %c0_2 = arith.constant 0 : index
    %2 = vector.load %arg3[%c2, %c0_2] : memref<8x128xf32, #tpu.memory_space<vmem>>, vector<1x128xf32>
    %c3 = arith.constant 3 : index
    %c0_3 = arith.constant 0 : index
    %3 = vector.load %arg3[%c3, %c0_3] : memref<8x128xf32, #tpu.memory_space<vmem>>, vector<1x128xf32>
    %c4 = arith.constant 4 : index
    %c0_4 = arith.constant 0 : index
    %4 = vector.load %arg3[%c4, %c0_4] : memref<8x128xf32, #tpu.memory_space<vmem>>, vector<1x128xf32>
    %c0_5 = arith.constant 0 : index
    %c0_6 = arith.constant 0 : index
    %5 = vector.load %arg1[%c0_5, %c0_6] : memref<8x16xf32, #tpu.memory_space<vmem>>, vector<8x16xf32>
    %6 = vector.broadcast %0 : vector<1x16xf32> to vector<8x16xf32>
    %7 = arith.subf %5, %6 : vector<8x16xf32>
    %8 = vector.broadcast %1 : vector<1x16xf32> to vector<8x16xf32>
    %9 = arith.mulf %7, %8 : vector<8x16xf32>
    %cst = arith.constant -1.000000e+01 : f32
    %cst_7 = arith.constant 1.000000e+01 : f32
    %10 = vector.broadcast %cst : f32 to vector<8x16xf32>
    %11 = arith.maximumf %10, %9 : vector<8x16xf32>
    %12 = vector.broadcast %cst_7 : f32 to vector<8x16xf32>
    %13 = arith.minimumf %12, %11 : vector<8x16xf32>
    %c0_8 = arith.constant 0 : index
    %c0_9 = arith.constant 0 : index
    %14 = vector.load %arg2[%c0_8, %c0_9] : memref<272x128xbf16, #tpu.memory_space<vmem>>, vector<16x128xbf16>
    %c16 = arith.constant 16 : index
    %c0_10 = arith.constant 0 : index
    %15 = vector.load %arg2[%c16, %c0_10] : memref<272x128xbf16, #tpu.memory_space<vmem>>, vector<128x128xbf16>
    %c144 = arith.constant 144 : index
    %c0_11 = arith.constant 0 : index
    %16 = vector.load %arg2[%c144, %c0_11] : memref<272x128xbf16, #tpu.memory_space<vmem>>, vector<128x128xbf16>
    %17 = arith.truncf %13 : vector<8x16xf32> to vector<8x16xbf16>
    %cst_12 = arith.constant dense<0.000000e+00> : vector<8x128xf32>
    %18 = tpu.matmul %17, %14, %cst_12 {dimension_numbers = #tpu.dot_dimension_numbers<[1], [0], [0], [1], [0, 0, 1, 1], [], []>} : vector<8x16xbf16>, vector<16x128xbf16>, vector<8x128xf32> -> vector<8x128xf32>
    %19 = vector.broadcast %2 : vector<1x128xf32> to vector<8x128xf32>
    %20 = arith.addf %18, %19 : vector<8x128xf32>
    %21 = math.tanh %20 : vector<8x128xf32>
    %22 = arith.truncf %21 : vector<8x128xf32> to vector<8x128xbf16>
    %cst_13 = arith.constant dense<0.000000e+00> : vector<8x128xf32>
    %23 = tpu.matmul %22, %15, %cst_13 {dimension_numbers = #tpu.dot_dimension_numbers<[1], [0], [0], [1], [0, 0, 1, 1], [], []>} : vector<8x128xbf16>, vector<128x128xbf16>, vector<8x128xf32> -> vector<8x128xf32>
    %24 = vector.broadcast %3 : vector<1x128xf32> to vector<8x128xf32>
    %25 = arith.addf %23, %24 : vector<8x128xf32>
    %26 = math.tanh %25 : vector<8x128xf32>
    %27 = arith.truncf %26 : vector<8x128xf32> to vector<8x128xbf16>
    %cst_14 = arith.constant dense<0.000000e+00> : vector<8x128xf32>
    %28 = tpu.matmul %27, %16, %cst_14 {dimension_numbers = #tpu.dot_dimension_numbers<[1], [0], [0], [1], [0, 0, 1, 1], [], []>} : vector<8x128xbf16>, vector<128x128xbf16>, vector<8x128xf32> -> vector<8x128xf32>
    %29 = vector.broadcast %4 : vector<1x128xf32> to vector<8x128xf32>
    %30 = arith.addf %28, %29 : vector<8x128xf32>
    %c0_15 = arith.constant 0 : index
    %c0_16 = arith.constant 0 : index
    %31 = vector.load %arg4[%c0_15, %c0_16] : memref<8x128xf32, #tpu.memory_space<vmem>>, vector<8x128xf32>
    tpu.vector_store %arg4[%c0_15, %c0_16], %30 {strides = array<i32>} : memref<8x128xf32, #tpu.memory_space<vmem>>, vector<8x128xf32>,
    return
  }
  func.func @transform_0(%arg0: i32) -> (i32, i32) {
    %c0_i32 = arith.constant 0 : i32
    %c0_i32_0 = arith.constant 0 : i32
    return %arg0, %c0_i32 : i32, i32
  }
  func.func @transform_1(%arg0: i32) -> (i32, i32) {
    %c0_i32 = arith.constant 0 : i32
    %c0_i32_0 = arith.constant 0 : i32
    %c0_i32_1 = arith.constant 0 : i32
    return %c0_i32, %c0_i32_0 : i32, i32
  }
  func.func @transform_2(%arg0: i32) -> (i32, i32) {
    %c0_i32 = arith.constant 0 : i32
    %c0_i32_0 = arith.constant 0 : i32
    %c0_i32_1 = arith.constant 0 : i32
    return %c0_i32, %c0_i32_0 : i32, i32
  }
  func.func @transform_3(%arg0: i32) -> (i32, i32) {
    %c0_i32 = arith.constant 0 : i32
    %c0_i32_0 = arith.constant 0 : i32
    return %arg0, %c0_i32 : i32, i32
  }
}

</mosaic_0001>

<llo_original>
// kernel: tpu_custom_call.1
$region0: #{tpu_custom_call.1}
  #allocation0 [shape = 'u32[]', space=smem, size = 0x4, offset = 0x4, fixed_abs, tag = 'smem constant byte address 0x4 - core index']
  #allocation1 [shape = 'u32[72,128]{1,0:T(1,128)}', space=vmem, size = 0x9000, scoped, tag = 'internal scratch']
  %s0 = inlined_call_operand.hbm [shape: f32[8,16], index: 0, kind: input, shape index: {}]
  %s1 = inlined_call_operand.hbm [shape: bf16[272,128], index: 1, kind: input, shape index: {}]
  %s2 = inlined_call_operand.hbm [shape: f32[8,128], index: 2, kind: input, shape index: {}]
  %s3 = inlined_call_operand.hbm [shape: f32[8,128], index: 3, kind: output, shape index: {}]
  %s4 = sld [smem:[#allocation0]]
  $region34: #{tpu_custom_call.1} parent=0
    _
  %s6 = ssub.s32 1, %s4
  %s7 = scalar_select 0, %s6, %s4
  $region1: #{tpu_custom_call.1} parent=0
    #allocation2 [shape = 'u8[4096]{0}', space=vmem, size = 0x1000, scoped, tag = 'input window, operand 0, single buffered']
    #allocation3 [shape = 's32[1]{0}', space=sflag, size = 0x4, scoped, tag = 'scoped memory for tpu_custom_call.1']
    #allocation4 [shape = 's32[1]{0}', space=sflag, size = 0x4, scoped, tag = 'scoped memory for tpu_custom_call.1']
    #allocation5 [shape = 'u8[69632]{0}', space=vmem, size = 0x11000, scoped, tag = 'input window, operand 1, single buffered']
    #allocation6 [shape = 's32[1]{0}', space=sflag, size = 0x4, scoped, tag = 'scoped memory for tpu_custom_call.1']
    #allocation7 [shape = 'u8[4096]{0}', space=vmem, size = 0x1000, scoped, tag = 'input window, operand 2, single buffered']
    #allocation8 [shape = 'u8[4096]{0}', space=vmem, size = 0x1000, scoped, tag = 'output window, operand 0, single buffered']
    %8 = vsyncpa [#allocation3], 0
    %9 = vsyncpa [#allocation6], 0
    %10 = vsyncpa [#allocation4], 0
    // Predicated region
    $region2: #{tpu_custom_call.1} parent=1 // pred_check
      _
    $region3: #{tpu_custom_call.1} parent=1 // pred_check_branch
      %12 = sbr.rel (0) target = $region5
    $region4: #{tpu_custom_call.1} parent=1 // pred_region
      %14 = vsyncadd [#allocation3], 0
      %s16 = sshll.u32 %s0, 4
      %s17 = int_to_ptr.hbm [resolvable:$true] %s16
      %s18 = sshll.u32 [#allocation2], 4
      %s19 = int_to_ptr.vmem [resolvable:$true] %s18
      %21 = dma.hbm_to_vmem [thread:$0]  %s17, 128, %s19, [#allocation3]
    $region5: #{tpu_custom_call.1} parent=1 // pred_fallthru
      _
    // Predicated region
    $region6: #{tpu_custom_call.1} parent=1 // pred_check
      _
    $region7: #{tpu_custom_call.1} parent=1 // pred_check_branch
      %23 = sbr.rel (0) target = $region9
    $region8: #{tpu_custom_call.1} parent=1 // pred_region
      %25 = vsyncadd [#allocation6], 0
      %s26 = sshll.u32 %s1, 4
      %s27 = int_to_ptr.hbm [resolvable:$true] %s26
      %s28 = sshll.u32 [#allocation5], 4
      %s29 = int_to_ptr.vmem [resolvable:$true] %s28
      %34 = dma.hbm_to_vmem [thread:$0]  %s27, 2176, %s29, [#allocation6], 64, 64, 4
    $region9: #{tpu_custom_call.1} parent=1 // pred_fallthru
      _
    // Predicated region
    $region10: #{tpu_custom_call.1} parent=1 // pred_check
      _
    $region11: #{tpu_custom_call.1} parent=1 // pred_check_branch
      %36 = sbr.rel (0) target = $region13
    $region12: #{tpu_custom_call.1} parent=1 // pred_region
      %38 = vsyncadd [#allocation6], 0
      %s40 = sshll.u32 %s2, 4
      %s41 = int_to_ptr.hbm [resolvable:$true] %s40
      %s42 = sshll.u32 [#allocation7], 4
      %s43 = int_to_ptr.vmem [resolvable:$true] %s42
      %45 = dma.hbm_to_vmem [thread:$0]  %s41, 128, %s43, [#allocation6]
    $region13: #{tpu_custom_call.1} parent=1 // pred_fallthru
      _
    // Predicated region
    $region14: #{tpu_custom_call.1} parent=1 // pred_check
      _
    $region15: #{tpu_custom_call.1} parent=1 // pred_check_branch
      %47 = sbr.rel (0) target = $region17
    $region16: #{tpu_custom_call.1} parent=1 // pred_region
      %49 = dma.done [#allocation3], 128
    $region17: #{tpu_custom_call.1} parent=1 // pred_fallthru
      _
    // Predicated region
    $region18: #{tpu_custom_call.1} parent=1 // pred_check
      _
    $region19: #{tpu_custom_call.1} parent=1 // pred_check_branch
      %51 = sbr.rel (0) target = $region21
    $region20: #{tpu_custom_call.1} parent=1 // pred_region
      %53 = dma.done [#allocation6], 2176
    $region21: #{tpu_custom_call.1} parent=1 // pred_fallthru
      _
    // Predicated region
    $region22: #{tpu_custom_call.1} parent=1 // pred_check
      _
    $region23: #{tpu_custom_call.1} parent=1 // pred_check_branch
      %55 = sbr.rel (0) target = $region25
    $region24: #{tpu_custom_call.1} parent=1 // pred_region
      %57 = dma.done [#allocation6], 128
    $region25: #{tpu_custom_call.1} parent=1 // pred_fallthru
      _
    %v59 = vld [vmem:[#allocation7] sm:$0x1]
    %v60 = vld [vmem:[#allocation7 + $0x1] sm:$0x1]
    %v61 = vld [vmem:[#allocation7 + $0x2] sm:$0x1]
    %v62 = vld [vmem:[#allocation7 + $0x3] sm:$0x1]
    %v63 = vld [vmem:[#allocation7 + $0x4] sm:$0x1]
    %v64 = vld [vmem:[#allocation2] sm:$0xff]
    %v65 = vperm.slane %v59, 0
    %v66 = vsub.f32 %v64, %v65
    %v67 = vperm.slane %v60, 0
    %v68 = vmul.f32 %v66, %v67
    %v69 = vmax.f32 %v68, -10.0
    %v70 = vmin.f32 %v69, 10.0
    %v71 = vld [vmem:[#allocation5] sm:$0xf]
    %v72 = vld [vmem:[#allocation5 + $0x4] sm:$0xf]
    %v73 = vld [vmem:[#allocation5 + $0x8] sm:$0xf]
    %v74 = vld [vmem:[#allocation5 + $0xc] sm:$0xf]
    %v75 = vld [vmem:[#allocation5 + $0x10] sm:$0xf]
    %v76 = vld [vmem:[#allocation5 + $0x14] sm:$0xf]
    %v77 = vld [vmem:[#allocation5 + $0x18] sm:$0xf]
    %v78 = vld [vmem:[#allocation5 + $0x1c] sm:$0xf]
    %v79 = vld [vmem:[#allocation5 + $0x20] sm:$0xf]
    %v80 = vld [vmem:[#allocation5 + $0x24] sm:$0xf]
    %v81 = vld [vmem:[#allocation5 + $0x28] sm:$0xf]
    %v82 = vld [vmem:[#allocation5 + $0x2c] sm:$0xf]
    %v83 = vld [vmem:[#allocation5 + $0x30] sm:$0xf]
    %v84 = vld [vmem:[#allocation5 + $0x34] sm:$0xf]
    %v85 = vld [vmem:[#allocation5 + $0x38] sm:$0xf]
    %v86 = vld [vmem:[#allocation5 + $0x3c] sm:$0xf]
    %v87 = vld [vmem:[#allocation5 + $0x40] sm:$0xf]
    %v88 = vld [vmem:[#allocation5 + $0x44] sm:$0xf]
    %v89 = vld [vmem:[#allocation5 + $0x48] sm:$0xf]
    %v90 = vld [vmem:[#allocation5 + $0x4c] sm:$0xf]
    %v91 = vld [vmem:[#allocation5 + $0x50] sm:$0xf]
    %v92 = vld [vmem:[#allocation5 + $0x54] sm:$0xf]
    %v93 = vld [vmem:[#allocation5 + $0x58] sm:$0xf]
    %v94 = vld [vmem:[#allocation5 + $0x5c] sm:$0xf]
    %v95 = vld [vmem:[#allocation5 + $0x60] sm:$0xf]
    %v96 = vld [vmem:[#allocation5 + $0x64] sm:$0xf]
    %v97 = vld [vmem:[#allocation5 + $0x68] sm:$0xf]
    %v98 = vld [vmem:[#allocation5 + $0x6c] sm:$0xf]
    %v99 = vld [vmem:[#allocation5 + $0x70] sm:$0xf]
    %v100 = vld [vmem:[#allocation5 + $0x74] sm:$0xf]
    %v101 = vld [vmem:[#allocation5 + $0x78] sm:$0xf]
    %v102 = vld [vmem:[#allocation5 + $0x7c] sm:$0xf]
    %v103 = vld [vmem:[#allocation5 + $0x80] sm:$0xf]
    %v104 = vld [vmem:[#allocation5 + $0x84] sm:$0xf]
    %v105 = vpack.c.bf16 %v70, %v70
    %v106 = vperm.slane %v61, 0
    %v109 = vunpack.c.l.b16 %v71
    %v110 = vunpack.c.l.b16 %v72
    %v111 = vpack.c.b16 %v110, %v109
    %vm113 = vcmask 130048
    %v115 = vsel %vm113, %v105, 0
    %117 = vmatpush.bf16.msra.mxu0 0
    %118 = vmatpush.bf16.msra.mxu0 0
    %119 = vmatpush.bf16.msra.mxu0 0
    %120 = vmatpush.bf16.msra.mxu0 0
    %121 = vmatpush.bf16.msra.mxu0 0
    %122 = vmatpush.bf16.msra.mxu0 0
    %123 = vmatpush.bf16.msra.mxu0 0
    %124 = vmatpush.bf16.msra.mxu0 %v111
    %125 = vmatmul.bf16.gmra.mxu0 %v115
    %v126 = vpop.f32.mrf.mxu0
    %v127 = vadd.f32 %v106, %v126
    %v128 = vpop.f32.mrf.mxu0
    %129 = vdwg.mxu0
    %v130 = vtanh.pop %v127
    %v131 = vpack.c.bf16 %v130, %v130
    %v132 = vperm.slane %v62, 0
    %v149 = vunpack.c.l.b16 %v73
    %v150 = vunpack.c.l.b16 %v74
    %v151 = vunpack.c.l.b16 %v75
    %v152 = vunpack.c.l.b16 %v76
    %v153 = vunpack.c.l.b16 %v77
    %v154 = vunpack.c.l.b16 %v78
    %v155 = vunpack.c.l.b16 %v79
    %v156 = vunpack.c.l.b16 %v80
    %v157 = vunpack.c.l.b16 %v81
    %v158 = vunpack.c.l.b16 %v82
    %v159 = vunpack.c.l.b16 %v83
    %v160 = vunpack.c.l.b16 %v84
    %v161 = vunpack.c.l.b16 %v85
    %v162 = vunpack.c.l.b16 %v86
    %v163 = vunpack.c.l.b16 %v87
    %v164 = vunpack.c.l.b16 %v88
    %v165 = vpack.c.b16 %v150, %v149
    %v166 = vpack.c.b16 %v152, %v151
    %v167 = vpack.c.b16 %v154, %v153
    %v168 = vpack.c.b16 %v156, %v155
    %v169 = vpack.c.b16 %v158, %v157
    %v170 = vpack.c.b16 %v160, %v159
    %v171 = vpack.c.b16 %v162, %v161
    %v172 = vpack.c.b16 %v164, %v163
    %181 = vmatpush.bf16.msra.mxu0 %v172
    %182 = vmatpush.bf16.msra.mxu0 %v171
    %183 = vmatpush.bf16.msra.mxu0 %v170
    %184 = vmatpush.bf16.msra.mxu0 %v169
    %185 = vmatpush.bf16.msra.mxu0 %v168
    %186 = vmatpush.bf16.msra.mxu0 %v167
    %187 = vmatpush.bf16.msra.mxu0 %v166
    %188 = vmatpush.bf16.msra.mxu0 %v165
    %189 = vmatmul.bf16.gmra.mxu0 %v131
    %v190 = vpop.f32.mrf.mxu0
    %v191 = vadd.f32 %v132, %v190
    %v192 = vpop.f32.mrf.mxu0
    %193 = vdwg.mxu0
    %v194 = vtanh.pop %v191
    %v195 = vpack.c.bf16 %v194, %v194
    %v196 = vperm.slane %v63, 0
    %v213 = vunpack.c.l.b16 %v89
    %v214 = vunpack.c.l.b16 %v90
    %v215 = vunpack.c.l.b16 %v91
    %v216 = vunpack.c.l.b16 %v92
    %v217 = vunpack.c.l.b16 %v93
    %v218 = vunpack.c.l.b16 %v94
    %v219 = vunpack.c.l.b16 %v95
    %v220 = vunpack.c.l.b16 %v96
    %v221 = vunpack.c.l.b16 %v97
    %v222 = vunpack.c.l.b16 %v98
    %v223 = vunpack.c.l.b16 %v99
    %v224 = vunpack.c.l.b16 %v100
    %v225 = vunpack.c.l.b16 %v101
    %v226 = vunpack.c.l.b16 %v102
    %v227 = vunpack.c.l.b16 %v103
    %v228 = vunpack.c.l.b16 %v104
    %v229 = vpack.c.b16 %v214, %v213
    %v230 = vpack.c.b16 %v216, %v215
    %v231 = vpack.c.b16 %v218, %v217
    %v232 = vpack.c.b16 %v220, %v219
    %v233 = vpack.c.b16 %v222, %v221
    %v234 = vpack.c.b16 %v224, %v223
    %v235 = vpack.c.b16 %v226, %v225
    %v236 = vpack.c.b16 %v228, %v227
    %245 = vmatpush.bf16.msra.mxu0 %v236
    %246 = vmatpush.bf16.msra.mxu0 %v235
    %247 = vmatpush.bf16.msra.mxu0 %v234
    %248 = vmatpush.bf16.msra.mxu0 %v233
    %249 = vmatpush.bf16.msra.mxu0 %v232
    %250 = vmatpush.bf16.msra.mxu0 %v231
    %251 = vmatpush.bf16.msra.mxu0 %v230
    %252 = vmatpush.bf16.msra.mxu0 %v229
    %253 = vmatmul.bf16.gmra.mxu0 %v195
    %v254 = vpop.f32.mrf.mxu0
    %v255 = vadd.f32 %v196, %v254
    %v256 = vpop.f32.mrf.mxu0
    %257 = vdwg.mxu0
    %258 = vst [vmem:[#allocation8] sm:$0xff] %v255
    // Predicated region
    $region26: #{tpu_custom_call.1} parent=1 // pred_check
      _
    $region27: #{tpu_custom_call.1} parent=1 // pred_check_branch
      %260 = sbr.rel (0) target = $region29
    $region28: #{tpu_custom_call.1} parent=1 // pred_region
      %262 = vsyncadd [#allocation4], 0
      %s264 = sshll.u32 [#allocation8], 4
      %s265 = int_to_ptr.vmem [resolvable:$true] %s264
      %s266 = sshll.u32 %s3, 4
      %s267 = int_to_ptr.hbm [resolvable:$true] %s266
      %269 = dma.vmem_to_hbm [thread:$0]  %s265, 128, %s267, [#allocation4]
    $region29: #{tpu_custom_call.1} parent=1 // pred_fallthru
      _
    // Predicated region
    $region30: #{tpu_custom_call.1} parent=1 // pred_check
      _
    $region31: #{tpu_custom_call.1} parent=1 // pred_check_branch
      %271 = sbr.rel (0) target = $region33
    $region32: #{tpu_custom_call.1} parent=1 // pred_region
      %273 = dma.done [#allocation4], 128
    $region33: #{tpu_custom_call.1} parent=1 // pred_fallthru
      _
    %274 = vsyncpa [#allocation3], 1
    %275 = vsyncpa [#allocation6], 1
    %276 = vsyncpa [#allocation4], 1

</llo_original>
